<compile_context>
chip_gen: v7x
topology: tpu7x:2x2x1
jax: 0.10.0
libtpu: 0.0.40
codegen_flags: <defaults>
</compile_context>

<pallas_src>
import functools
import math

import jax
import jax.numpy as jnp
from jax.experimental import pallas as pl
from jax.experimental.pallas import tpu as pltpu


def _next_pow2(v: int) -> int:
    return 1 if v <= 1 else 1 << (v - 1).bit_length()


def _flip_prefix_tile(x, *, ks, group):
    """Flip the first `ks` lanes of every `group`-wide lane group of tile `x`.

    `group` is a power-of-two sub-row width (packed layout) or None, meaning
    one group per tile row.  Pure lane movement (XLU rolls + VPU selects);
    bit-exact for every dtype.
    """
    w = x.shape[-1]
    lane = jax.lax.broadcasted_iota(jnp.int32, x.shape, 1)
    if group is not None and group != w:
        pos = lane & (group - 1)          # group is a power of two
        gwidth = group
    else:
        pos = lane
        gwidth = w

    l = _next_pow2(ks)
    if l <= gwidth:
        # Butterfly reversal of the first `l` lanes of every group: reversing
        # a 2^p window == complementing the low p bits of the lane index; one
        # bit (one pairwise block swap = 2 rolls + 1 select) per step.
        rev = x
        for k in range(l.bit_length() - 1):                    # log2(l) steps
            s = 1 << k
            from_lo = pltpu.roll(rev, shift=s, axis=1)         # [j] <- [j-s]
            from_hi = pltpu.roll(rev, shift=(-s) % w, axis=1)  # [j] <- [j+s]
            rev = jnp.where((lane & s) != 0, from_lo, from_hi)
        if l != ks:
            # rev[j] = x[l-1-j]; shift left by (l-ks) so lane j carries
            # x[ks-1-j] for j < ks.
            rev = pltpu.roll(rev, shift=(ks - l) % w, axis=1)
        return jnp.where(pos < ks, rev, x)

    # Fallback: O(ks) roll + select chain.  Only reachable for non-power-of-two
    # row widths with ks larger than the widest power-of-two window; the
    # wrapper's column tiling keeps all hot paths on the butterfly above.
    # TODO(synk): pad such rows to a power-of-two lane width instead.
    out = x
    for j in range(ks):
        src = ks - 1 - j
        if src == j:
            continue
        out = jnp.where(pos == j, pltpu.roll(x, shift=(j - src) % w, axis=1), out)
    return out


def _transpose_flip_kernel(x_ref, o_ref, *, ks, group):
    # Column tile 0 contains the whole flip region [0, ks); every other column
    # tile is a straight copy (no wasted XLU/VPU work on wide rows).
    @pl.when(pl.program_id(1) == 0)
    def _():
        o_ref[...] = _flip_prefix_tile(x_ref[...], ks=ks, group=group)

    @pl.when(pl.program_id(1) != 0)
    def _():
        o_ref[...] = x_ref[...]


def _tpu_budget():
    """(max_block_bytes, vmem_limit_bytes, num_tensorcores) for this chip."""
    try:
        vmem_cap = int(getattr(pltpu.get_tpu_info(), "vmem_capacity_bytes"))
    except Exception:
        vmem_cap = 64 * 1024 * 1024                      # v7x-safe default
    if vmem_cap >= 96 * 1024 * 1024:                     # v5e / v6e: 128 MiB VMEM
        max_block_bytes, vmem_limit = 4 * 1024 * 1024, 64 * 1024 * 1024
    else:                                                # v7x: 64 MiB per TC
        max_block_bytes, vmem_limit = 2 * 1024 * 1024, 36 * 1024 * 1024
    try:
        kind = str(getattr(jax.devices()[0], "device_kind", "")).lower()
    except Exception:
        kind = ""
    if "lite" in kind or "v5e" in kind or "v6e" in kind or "v6" in kind:
        num_tc = 1
    elif any(t in kind for t in ("v4", "v5p", "v5", "v7", "tpu7")):
        num_tc = 2                                       # megacore / dual-TC
    else:
        num_tc = 1
    return max_block_bytes, vmem_limit, num_tc


def transpose_flip(x, kernel_size=1):
    """Pallas implementation of TransposeFlip.forward (exact, any dtype)."""
    orig_shape = x.shape
    if x.ndim == 0 or x.size == 0:
        return x
    n = orig_shape[-1]
    m = math.prod(orig_shape[:-1])

    # Torch slice semantics for the prefix length, incl. negative kernel_size
    # (x[..., :-k].flip ++ x[..., -k:]  ==  prefix of length n - k).
    k = int(kernel_size)
    ks = max(0, n + k) if k < 0 else min(k, n)
    if ks <= 1:
        return x                      # identity permutation: no kernel launch

    itemsize = jnp.dtype(x.dtype).itemsize
    sub = max(8, 32 // itemsize)      # dtype-native sublane multiple
    max_block_bytes, vmem_limit, num_tc = _tpu_budget()

    # ---- layout: lane-dense packing of narrow rows -------------------------
    pad_rows = 0
    pack = 1
    if n <= 128 and (n & (n - 1)) == 0:
        # Fold 128//n logical rows into one full 128-lane row (free row-major
        # reshape; rows padded so all stores stay full-width / unmasked).
        pack = 128 // n
        pad_rows = (-m) % pack
        x2 = x.reshape(m, n)
        if pad_rows:
            x2 = jnp.pad(x2, ((0, pad_rows), (0, 0)))
        rows, w = (m + pad_rows) // pack, 128
        x2 = x2.reshape(rows, w)
        group = n if n < 128 else None
        tc, ncol = 128, 1
    else:
        rows, w = m, n
        x2 = x.reshape(rows, w)
        group = None
        l = _next_pow2(ks)
        tc_min = max(128, l)          # power of two, multiple of 128
        if w <= max(512, tc_min):
            # Single column tile per row (full row, padded up if l > w).
            tc = w if l <= w else tc_min
            ncol = 1
        else:
            # Wide rows: the flip region lives entirely in column tile 0.
            tc = max(512, tc_min)
            ncol = pl.cdiv(w, tc)

    # ---- row tiling (bounds the data tile AND its int32 iota/mask temps) ---
    bytes_per_row = tc * max(itemsize, 4)
    tr = max(sub, (max_block_bytes // max(1, bytes_per_row)) // sub * sub)
    if rows <= tr:
        if num_tc > 1 and rows > sub:
            half = -(-rows // 2)                 # split so both TCs get work
            tr = -(-half // sub) * sub
        else:
            tr = rows                            # single block == full dim
    elif num_tc > 1:
        steps = -(-rows // tr)
        if (steps * ncol) % 2 == 1:              # even step count for 2 TCs
            steps += 1
            tr = max(sub, (-(-rows // steps) + sub - 1) // sub * sub)

    grid = (pl.cdiv(rows, tr), ncol)
    out = pl.pallas_call(
        functools.partial(_transpose_flip_kernel, ks=ks, group=group),
        out_shape=jax.ShapeDtypeStruct((rows, w), x.dtype),
        grid=grid,
        in_specs=[pl.BlockSpec((tr, tc), lambda i, j: (i, j))],
        out_specs=pl.BlockSpec((tr, tc), lambda i, j: (i, j)),
        compiler_params=pltpu.CompilerParams(
            dimension_semantics=("parallel", "parallel"),
            vmem_limit_bytes=vmem_limit),
        cost_estimate=pl.CostEstimate(
            flops=0, transcendentals=0,
            bytes_accessed=2 * rows * w * itemsize),
    )(x2)

    if pad_rows:
        out = out.reshape(rows * pack, n)[:m]
    return out.reshape(orig_shape)


def _reference(x, kernel_size):
    return jnp.concatenate(
        [x[..., :kernel_size][..., ::-1], x[..., kernel_size:]], axis=-1)


if __name__ == "__main__":
    key = jax.random.PRNGKey(0)

    # Primary case: small NCHW-like input; flip acts on the last (W) axis.
    x = jax.random.normal(key, (2, 4, 16, 16), dtype=jnp.float32)
    for ksz in (5, 16, 20, -3):
        y = jax.block_until_ready(transpose_flip(x, kernel_size=ksz))
        y_ref = _reference(x, ksz)
        assert y.shape == x.shape and y.dtype == x.dtype
        assert jnp.array_equal(y, y_ref), f"mismatch vs reference (ks={ksz})"

    # Wide-row case: exercises the column-tiled (flip tile + copy tiles) path.
    xw = jax.random.normal(jax.random.PRNGKey(1), (4, 8, 640), dtype=jnp.float32)
    yw = jax.block_until_ready(transpose_flip(xw, kernel_size=200))
    assert jnp.array_equal(yw, _reference(xw, 200)), "mismatch vs reference (wide)"

    print("KERNEL_OK")
</pallas_src>

<mosaic_0001>
module attributes {stable_mosaic.version = 11 : i64} {
  func.func @_transpose_flip_kernel(%arg0: i32, %arg1: i32, %arg2: memref<16x128xf32, #tpu.memory_space<vmem>>, %arg3: memref<16x128xf32, #tpu.memory_space<vmem>>) attributes {dimension_semantics = [#tpu.dimension_semantics<parallel>, #tpu.dimension_semantics<parallel>], iteration_bounds = array<i64: 1, 1>, scalar_prefetch = 0 : i64, scratch_operands = 0 : i64, tpu.core_type = #tpu.core_type<tc>, window_params = [{transform_indices = @transform_0, window_bounds = array<i64: 16, 128>}, {transform_indices = @transform_1, window_bounds = array<i64: 16, 128>}]} {
    %c0_i32 = arith.constant 0 : i32
    %0 = arith.cmpi eq, %arg1, %c0_i32 : i32
    %1 = arith.extui %0 : i1 to i32
    %c0_i32_0 = arith.constant 0 : i32
    %2 = arith.cmpi ne, %1, %c0_i32_0 : i32
    scf.if %2 {
      %c0 = arith.constant 0 : index
      %c0_3 = arith.constant 0 : index
      %6 = vector.load %arg2[%c0, %c0_3] : memref<16x128xf32, #tpu.memory_space<vmem>>, vector<16x128xf32>
      %7 = tpu.iota {dimensions = array<i32: 1>} : vector<16x128xi32>
      %c15_i32 = arith.constant 15 : i32
      %8 = vector.broadcast %c15_i32 : i32 to vector<16x128xi32>
      %9 = arith.andi %7, %8 : vector<16x128xi32>
      %c1_i32 = arith.constant 1 : i32
      %10 = tpu.dynamic_rotate %6 by %c1_i32 dim 1 : vector<16x128xf32>, i32 -> vector<16x128xf32>
      %c127_i32 = arith.constant 127 : i32
      %11 = tpu.dynamic_rotate %6 by %c127_i32 dim 1 : vector<16x128xf32>, i32 -> vector<16x128xf32>
      %c1_i32_4 = arith.constant 1 : i32
      %12 = vector.broadcast %c1_i32_4 : i32 to vector<16x128xi32>
      %13 = arith.andi %7, %12 : vector<16x128xi32>
      %c0_i32_5 = arith.constant 0 : i32
      %14 = vector.broadcast %c0_i32_5 : i32 to vector<16x128xi32>
      %15 = arith.cmpi ne, %13, %14 : vector<16x128xi32>
      %16 = arith.select %15, %10, %11 : vector<16x128xi1>, vector<16x128xf32>
      %c2_i32 = arith.constant 2 : i32
      %17 = tpu.dynamic_rotate %16 by %c2_i32 dim 1 : vector<16x128xf32>, i32 -> vector<16x128xf32>
      %c126_i32 = arith.constant 126 : i32
      %18 = tpu.dynamic_rotate %16 by %c126_i32 dim 1 : vector<16x128xf32>, i32 -> vector<16x128xf32>
      %c2_i32_6 = arith.constant 2 : i32
      %19 = vector.broadcast %c2_i32_6 : i32 to vector<16x128xi32>
      %20 = arith.andi %7, %19 : vector<16x128xi32>
      %c0_i32_7 = arith.constant 0 : i32
      %21 = vector.broadcast %c0_i32_7 : i32 to vector<16x128xi32>
      %22 = arith.cmpi ne, %20, %21 : vector<16x128xi32>
      %23 = arith.select %22, %17, %18 : vector<16x128xi1>, vector<16x128xf32>
      %c4_i32 = arith.constant 4 : i32
      %24 = tpu.dynamic_rotate %23 by %c4_i32 dim 1 : vector<16x128xf32>, i32 -> vector<16x128xf32>
      %c124_i32 = arith.constant 124 : i32
      %25 = tpu.dynamic_rotate %23 by %c124_i32 dim 1 : vector<16x128xf32>, i32 -> vector<16x128xf32>
      %c4_i32_8 = arith.constant 4 : i32
      %26 = vector.broadcast %c4_i32_8 : i32 to vector<16x128xi32>
      %27 = arith.andi %7, %26 : vector<16x128xi32>
      %c0_i32_9 = arith.constant 0 : i32
      %28 = vector.broadcast %c0_i32_9 : i32 to vector<16x128xi32>
      %29 = arith.cmpi ne, %27, %28 : vector<16x128xi32>
      %30 = arith.select %29, %24, %25 : vector<16x128xi1>, vector<16x128xf32>
      %c125_i32 = arith.constant 125 : i32
      %31 = tpu.dynamic_rotate %30 by %c125_i32 dim 1 : vector<16x128xf32>, i32 -> vector<16x128xf32>
      %c5_i32 = arith.constant 5 : i32
      %32 = vector.broadcast %c5_i32 : i32 to vector<16x128xi32>
      %33 = arith.cmpi slt, %9, %32 : vector<16x128xi32>
      %34 = arith.select %33, %31, %6 : vector<16x128xi1>, vector<16x128xf32>
      %c0_10 = arith.constant 0 : index
      %c0_11 = arith.constant 0 : index
      %35 = vector.load %arg3[%c0_10, %c0_11] : memref<16x128xf32, #tpu.memory_space<vmem>>, vector<16x128xf32>
      tpu.vector_store %arg3[%c0_10, %c0_11], %34 {strides = array<i32>} : memref<16x128xf32, #tpu.memory_space<vmem>>, vector<16x128xf32>,
    } else {
    }
    %c0_i32_1 = arith.constant 0 : i32
    %3 = arith.cmpi ne, %arg1, %c0_i32_1 : i32
    %4 = arith.extui %3 : i1 to i32
    %c0_i32_2 = arith.constant 0 : i32
    %5 = arith.cmpi ne, %4, %c0_i32_2 : i32
    scf.if %5 {
      %c0 = arith.constant 0 : index
      %c0_3 = arith.constant 0 : index
      %6 = vector.load %arg2[%c0, %c0_3] : memref<16x128xf32, #tpu.memory_space<vmem>>, vector<16x128xf32>
      %c0_4 = arith.constant 0 : index
      %c0_5 = arith.constant 0 : index
      %7 = vector.load %arg3[%c0_4, %c0_5] : memref<16x128xf32, #tpu.memory_space<vmem>>, vector<16x128xf32>
      tpu.vector_store %arg3[%c0_4, %c0_5], %6 {strides = array<i32>} : memref<16x128xf32, #tpu.memory_space<vmem>>, vector<16x128xf32>,
    } else {
    }
    return
  }
  func.func @transform_0(%arg0: i32, %arg1: i32) -> (i32, i32) {
    %c0_i32 = arith.constant 0 : i32
    return %arg0, %arg1 : i32, i32
  }
  func.func @transform_1(%arg0: i32, %arg1: i32) -> (i32, i32) {
    %c0_i32 = arith.constant 0 : i32
    return %arg0, %arg1 : i32, i32
  }
}

</mosaic_0001>

<llo_original>
// kernel: tpu_custom_call.1
$region0: #{tpu_custom_call.1}
  #allocation0 [shape = 'u32[]', space=smem, size = 0x4, offset = 0x4, fixed_abs, tag = 'smem constant byte address 0x4 - core index']
  #allocation1 [shape = 'u32[144,128]{1,0:T(1,128)}', space=vmem, size = 0x12000, scoped, tag = 'internal scratch']
  %s0 = inlined_call_operand.hbm [shape: f32[16,128], index: 0, kind: input, shape index: {}]
  %s1 = inlined_call_operand.hbm [shape: f32[16,128], index: 1, kind: output, shape index: {}]
  %s2 = sld [smem:[#allocation0]]
  $region26: #{tpu_custom_call.1} parent=0
    _
  %s4 = ssub.s32 1, %s2
  %s5 = scalar_select 0, %s4, %s2
  $region1: #{tpu_custom_call.1} parent=0
    #allocation2 [shape = 'u8[8192]{0}', space=vmem, size = 0x2000, scoped, tag = 'input window, operand 0, single buffered']
    #allocation3 [shape = 's32[1]{0}', space=sflag, size = 0x4, scoped, tag = 'scoped memory for tpu_custom_call.1']
    #allocation4 [shape = 's32[1]{0}', space=sflag, size = 0x4, scoped, tag = 'scoped memory for tpu_custom_call.1']
    #allocation5 [shape = 'u8[8192]{0}', space=vmem, size = 0x2000, scoped, tag = 'output window, operand 0, single buffered']
    %6 = vsyncpa [#allocation3], 0
    %7 = vsyncpa [#allocation4], 0
    // Predicated region
    $region2: #{tpu_custom_call.1} parent=1 // pred_check
      _
    $region3: #{tpu_custom_call.1} parent=1 // pred_check_branch
      %9 = sbr.rel (0) target = $region5
    $region4: #{tpu_custom_call.1} parent=1 // pred_region
      %s11 = ssub.s32 256, 256
      %12 = vsyncadd [#allocation3], %s11
      %s13 = sshll.u32 [#allocation2], 4
      %s14 = int_to_ptr.vmem [resolvable:$true] %s13
      %19 = dma.hbm_to_vmem [thread:$0]  %s0, 256, %s14, [#allocation3], 128, 128, 8
    $region5: #{tpu_custom_call.1} parent=1 // pred_fallthru
      _
    // Predicated region
    $region6: #{tpu_custom_call.1} parent=1 // pred_check
      _
    $region7: #{tpu_custom_call.1} parent=1 // pred_check_branch
      %21 = sbr.rel (0) target = $region9
    $region8: #{tpu_custom_call.1} parent=1 // pred_region
      %22 = dma.done [#allocation3], 256
    $region9: #{tpu_custom_call.1} parent=1 // pred_fallthru
      _
    %p23 = scmp.eq.s32.totalorder 0, 0
    // Predicated region
    $region10: #{tpu_custom_call.1} parent=1 // pred_check
      %p24 = pneg %p23
    $region11: #{tpu_custom_call.1} parent=1 // pred_check_branch
      %26 = sbr.rel (%p24) target = $region13
    $region12: #{tpu_custom_call.1} parent=1 // pred_region
      %v27 = vld [vmem:[#allocation2] sm:$0xff]
      %v28 = vld [vmem:[#allocation2 + $0x8] sm:$0xff]
      %v29 = vlaneseq
      %v30 = vand.u32 %v29, 127
      %v31 = vand.u32 %v30, 15
      %32 = vrot.lane.b32.xlu0 %v27, 1
      %v33 = vpop.permute.xlu0 %32
      %34 = vrot.lane.b32.xlu0 %v28, 1
      %v35 = vpop.permute.xlu0 %34
      %36 = vrot.lane.b32.xlu0 %v27, 127
      %v37 = vpop.permute.xlu0 %36
      %38 = vrot.lane.b32.xlu0 %v28, 127
      %v39 = vpop.permute.xlu0 %38
      %v40 = vand.u32 %v30, 1
      %vm41 = vcmp.ne.s32.totalorder %v40, 0
      %v42 = vsel %vm41, %v33, %v37
      %v43 = vsel %vm41, %v35, %v39
      %44 = vrot.lane.b32.xlu0 %v42, 2
      %v45 = vpop.permute.xlu0 %44
      %46 = vrot.lane.b32.xlu0 %v43, 2
      %v47 = vpop.permute.xlu0 %46
      %48 = vrot.lane.b32.xlu0 %v42, 126
      %v49 = vpop.permute.xlu0 %48
      %50 = vrot.lane.b32.xlu0 %v43, 126
      %v51 = vpop.permute.xlu0 %50
      %v52 = vand.u32 %v30, 2
      %vm53 = vcmp.ne.s32.totalorder %v52, 0
      %v54 = vsel %vm53, %v45, %v49
      %v55 = vsel %vm53, %v47, %v51
      %56 = vrot.lane.b32.xlu0 %v54, 4
      %v57 = vpop.permute.xlu0 %56
      %58 = vrot.lane.b32.xlu0 %v55, 4
      %v59 = vpop.permute.xlu0 %58
      %60 = vrot.lane.b32.xlu0 %v54, 124
      %v61 = vpop.permute.xlu0 %60
      %62 = vrot.lane.b32.xlu0 %v55, 124
      %v63 = vpop.permute.xlu0 %62
      %v64 = vand.u32 %v30, 4
      %vm65 = vcmp.ne.s32.totalorder %v64, 0
      %v66 = vsel %vm65, %v57, %v61
      %v67 = vsel %vm65, %v59, %v63
      %68 = vrot.lane.b32.xlu0 %v66, 125
      %v69 = vpop.permute.xlu0 %68
      %70 = vrot.lane.b32.xlu0 %v67, 125
      %v71 = vpop.permute.xlu0 %70
      %vm72 = vcmp.lt.s32.totalorder %v31, 5
      %v73 = vsel %vm72, %v69, %v27
      %v74 = vsel %vm72, %v71, %v28
      %75 = vst [vmem:[#allocation5] sm:$0xff] %v73
      %76 = vst [vmem:[#allocation5 + $0x8] sm:$0xff] %v74
    $region13: #{tpu_custom_call.1} parent=1 // pred_fallthru
      _
    %p77 = scmp.ne.s32.totalorder 0, 0
    // Predicated region
    $region14: #{tpu_custom_call.1} parent=1 // pred_check
      %p78 = pneg %p77
    $region15: #{tpu_custom_call.1} parent=1 // pred_check_branch
      %80 = sbr.rel (%p78) target = $region17
    $region16: #{tpu_custom_call.1} parent=1 // pred_region
      %v81 = vld [vmem:[#allocation2] sm:$0xff]
      %v82 = vld [vmem:[#allocation2 + $0x8] sm:$0xff]
      %83 = vst [vmem:[#allocation5] sm:$0xff] %v81
      %84 = vst [vmem:[#allocation5 + $0x8] sm:$0xff] %v82
    $region17: #{tpu_custom_call.1} parent=1 // pred_fallthru
      _
    // Predicated region
    $region18: #{tpu_custom_call.1} parent=1 // pred_check
      _
    $region19: #{tpu_custom_call.1} parent=1 // pred_check_branch
      %86 = sbr.rel (0) target = $region21
    $region20: #{tpu_custom_call.1} parent=1 // pred_region
      %s88 = ssub.s32 256, 256
      %89 = vsyncadd [#allocation4], %s88
      %s90 = sshll.u32 [#allocation5], 4
      %s91 = int_to_ptr.vmem [resolvable:$true] %s90
      %96 = dma.vmem_to_hbm [thread:$0]  %s91, 256, %s1, [#allocation4], 128, 128, 8
    $region21: #{tpu_custom_call.1} parent=1 // pred_fallthru
      _
    // Predicated region
    $region22: #{tpu_custom_call.1} parent=1 // pred_check
      _
    $region23: #{tpu_custom_call.1} parent=1 // pred_check_branch
      %98 = sbr.rel (0) target = $region25
    $region24: #{tpu_custom_call.1} parent=1 // pred_region
      %99 = dma.done [#allocation4], 256
    $region25: #{tpu_custom_call.1} parent=1 // pred_fallthru
      _
    %100 = vsyncpa [#allocation3], 1
    %101 = vsyncpa [#allocation4], 1

</llo_original>
